<compile_context>
chip_gen: v6e
topology: v6e:2x2x1
jax: 0.10.0
libtpu: 0.0.40
codegen_flags: <defaults>
</compile_context>

<pallas_src>
import math

import jax
import jax.numpy as jnp
import numpy as np
from jax.experimental import pallas as pl
from jax.experimental.pallas import tpu as pltpu


def _build_shuffle_matrices(weight, bias, W):
    """Fold column taps + reflect padding + channel weights + PixelShuffle column
    interleave into constant matrices.

    weight: (4, 1, 3, 3), bias: (4,)
    returns
      m    : (2, 3, W, 2W) f32 ; m[r, kh] maps a row-tap slab (H, W) -> (H, 2W)
      brow : (2, 1, 2W)    f32 ; per-output-column bias for each row parity
    """
    w = weight[:, 0].astype(jnp.float32)  # (4, 3, 3)

    def refl(t):  # reflect padding index (pad=1, edge excluded, PyTorch 'reflect')
        if t < 0:
            return -t
        if t > W - 1:
            return 2 * (W - 1) - t
        return t

    r_l, kh_l, kw_l, c_l, row_l, col_l = [], [], [], [], [], []
    for r in range(2):          # output-row parity
        for s in range(2):      # output-column parity
            c = 2 * r + s       # conv channel feeding out[2i+r, 2j+s]
            for kh in range(3):
                for kw in range(3):
                    for j in range(W):
                        r_l.append(r)
                        kh_l.append(kh)
                        kw_l.append(kw)
                        c_l.append(c)
                        row_l.append(refl(j + kw - 1))
                        col_l.append(2 * j + s)

    vals = w[np.asarray(c_l), np.asarray(kh_l), np.asarray(kw_l)]
    m = jnp.zeros((2, 3, W, 2 * W), jnp.float32)
    # duplicate (row, col) targets at the reflect boundary accumulate correctly
    m = m.at[np.asarray(r_l), np.asarray(kh_l),
             np.asarray(row_l), np.asarray(col_l)].add(vals)

    b = bias.astype(jnp.float32)
    brow = jnp.stack([jnp.tile(b[:2], W), jnp.tile(b[2:], W)], axis=0)  # (2, 2W)
    brow = brow.reshape(2, 1, 2 * W)
    return m, brow


def _upsample_mask_kernel(x_ref, m_ref, b_ref, o_ref):
    # x_ref: (1, H, W)      one single-channel mask image
    # m_ref: (2, 3, W, 2W)  fused col-tap / reflect / pixel-shuffle matrices
    # b_ref: (2, 1, 2W)     per-output-column bias rows
    # o_ref: (1, H, 2, 2W)  dim 2 = output-row parity (merged into 2H in the wrapper)
    H = x_ref.shape[1]
    two_w = o_ref.shape[3]

    x = x_ref[0]  # (H, W)

    # Row taps with in-kernel reflect padding: rows[kh][i] = x[reflect(i + kh - 1)]
    top = x[1:2, :]
    bot = x[H - 2:H - 1, :]
    rows = (
        jnp.concatenate([top, x[:H - 1, :]], axis=0),  # kh = 0  (row i-1)
        x,                                             # kh = 1  (row i)
        jnp.concatenate([x[1:, :], bot], axis=0),      # kh = 2  (row i+1)
    )

    # One lane-dense (H, 2W) slab per output-row parity: three K=W matmuls fuse
    # the column taps, reflect boundary, channel weights and column interleave.
    for r in range(2):
        acc = jnp.zeros((H, two_w), jnp.float32)
        for kh in range(3):
            acc = acc + jnp.dot(rows[kh], m_ref[r, kh],
                                preferred_element_type=jnp.float32)
        acc = acc + b_ref[r]                       # (1, 2W) broadcast
        o_ref[0, :, r, :] = acc.astype(o_ref.dtype)


def upsample_mask(x_nchw, weight, bias):
    """x_nchw: (B, 1, H, W); weight: (4, 1, 3, 3); bias: (4,) -> (B, 1, 2H, 2W)."""
    B, Cin, H, W = x_nchw.shape
    assert Cin == 1
    x2 = x_nchw.reshape(B, H, W)                       # metadata-only
    m, brow = _build_shuffle_matrices(weight, bias, W)

    out = pl.pallas_call(
        _upsample_mask_kernel,
        out_shape=jax.ShapeDtypeStruct((B, H, 2, 2 * W), x_nchw.dtype),
        grid_spec=pltpu.PrefetchScalarGridSpec(
            num_scalar_prefetch=0,
            grid=(B,),
            in_specs=[
                pl.BlockSpec((1, H, W), lambda b: (b, 0, 0)),
                pl.BlockSpec((2, 3, W, 2 * W), lambda b: (0, 0, 0, 0)),
                pl.BlockSpec((2, 1, 2 * W), lambda b: (0, 0, 0)),
            ],
            out_specs=pl.BlockSpec((1, H, 2, 2 * W), lambda b: (b, 0, 0, 0)),
        ),
        compiler_params=pltpu.CompilerParams(
            dimension_semantics=("parallel",)),
    )(x2, m, brow)

    # (B, H, 2, 2W) -> (B, 1, 2H, 2W): contiguous merge, metadata-only (PixelShuffle
    # row interleave is already baked into the kernel's output layout).
    return out.reshape(B, 1, 2 * H, 2 * W)


def _reference(x, weight, bias):
    """Pure-JAX reference: reflect-pad conv(1->4, bias) + PixelShuffle(2)."""
    B, _, H, W = x.shape
    xpad = jnp.pad(x, ((0, 0), (0, 0), (1, 1), (1, 1)), mode="reflect")
    y = jax.lax.conv_general_dilated(
        xpad, weight, window_strides=(1, 1), padding="VALID",
        dimension_numbers=("NCHW", "OIHW", "NCHW"))
    y = y + bias.reshape(1, 4, 1, 1)
    # PixelShuffle(2): (B, 4, H, W) -> (B, 1, 2H, 2W)
    y = y.reshape(B, 1, 2, 2, H, W).transpose(0, 1, 4, 2, 5, 3)
    return y.reshape(B, 1, 2 * H, 2 * W)


if __name__ == "__main__":
    key = jax.random.PRNGKey(0)
    k_x, k_w, k_b = jax.random.split(key, 3)

    # Single-channel mask input; W chosen so the output width 2W = 128 is lane-dense.
    B, H, W = 2, 16, 64
    x = jax.random.normal(k_x, (B, 1, H, W), dtype=jnp.float32)

    # Conv2d(1, 4, 3) init-style weights/bias (bias=True by default in the module).
    fan_in = 1 * 3 * 3
    bound = 1.0 / math.sqrt(fan_in)
    w = jax.random.uniform(k_w, (4, 1, 3, 3), dtype=jnp.float32,
                           minval=-bound, maxval=bound)
    b = jax.random.uniform(k_b, (4,), dtype=jnp.float32,
                           minval=-bound, maxval=bound)

    out = upsample_mask(x, w, b)
    out = jax.block_until_ready(out)

    ref = _reference(x, w, b)
    assert out.shape == (B, 1, 2 * H, 2 * W)
    assert jnp.allclose(out, ref, atol=1e-4, rtol=1e-4)

    print("KERNEL_OK")
</pallas_src>

<mosaic_0001>
module attributes {stable_mosaic.version = 11 : i64} {
  func.func @_upsample_mask_kernel(%arg0: i32, %arg1: memref<1x16x64xf32, #tpu.memory_space<vmem>>, %arg2: memref<2x3x64x128xf32, #tpu.memory_space<vmem>>, %arg3: memref<2x1x128xf32, #tpu.memory_space<vmem>>, %arg4: memref<1x16x2x128xf32, #tpu.memory_space<vmem>>) attributes {dimension_semantics = [#tpu.dimension_semantics<parallel>], iteration_bounds = array<i64: 2>, scalar_prefetch = 0 : i64, scratch_operands = 0 : i64, tpu.core_type = #tpu.core_type<tc>, window_params = [{transform_indices = @transform_0, window_bounds = array<i64: 1, 16, 64>}, {pipeline_mode = #tpu.pipeline_mode<synchronous>, transform_indices = @transform_1, window_bounds = array<i64: 2, 3, 64, 128>}, {pipeline_mode = #tpu.pipeline_mode<synchronous>, transform_indices = @transform_2, window_bounds = array<i64: 2, 1, 128>}, {transform_indices = @transform_3, window_bounds = array<i64: 1, 16, 2, 128>}]} {
    %c0 = arith.constant 0 : index
    %c0_0 = arith.constant 0 : index
    %c0_1 = arith.constant 0 : index
    %0 = vector.load %arg1[%c0, %c0_0, %c0_1] : memref<1x16x64xf32, #tpu.memory_space<vmem>>, vector<1x16x64xf32>
    %1 = vector.shape_cast %0 : vector<1x16x64xf32> to vector<16x64xf32>
    %2 = vector.extract_strided_slice %1 {offsets = [1, 0], sizes = [1, 64], strides = [1, 1]} : vector<16x64xf32> to vector<1x64xf32>
    %3 = vector.extract_strided_slice %1 {offsets = [14, 0], sizes = [1, 64], strides = [1, 1]} : vector<16x64xf32> to vector<1x64xf32>
    %4 = vector.extract_strided_slice %1 {offsets = [0, 0], sizes = [15, 64], strides = [1, 1]} : vector<16x64xf32> to vector<15x64xf32>
    %5 = tpu.concatenate %2, %4 in 0 : vector<1x64xf32>, vector<15x64xf32> -> vector<16x64xf32>
    %6 = vector.extract_strided_slice %1 {offsets = [1, 0], sizes = [15, 64], strides = [1, 1]} : vector<16x64xf32> to vector<15x64xf32>
    %7 = tpu.concatenate %6, %3 in 0 : vector<15x64xf32>, vector<1x64xf32> -> vector<16x64xf32>
    %cst = arith.constant 0.000000e+00 : f32
    %8 = vector.broadcast %cst : f32 to vector<16x128xf32>
    %c0_2 = arith.constant 0 : index
    %c0_3 = arith.constant 0 : index
    %c0_4 = arith.constant 0 : index
    %c0_5 = arith.constant 0 : index
    %9 = vector.load %arg2[%c0_2, %c0_3, %c0_4, %c0_5] : memref<2x3x64x128xf32, #tpu.memory_space<vmem>>, vector<1x1x64x128xf32>
    %10 = vector.shape_cast %9 : vector<1x1x64x128xf32> to vector<64x128xf32>
    %cst_6 = arith.constant dense<0.000000e+00> : vector<16x128xf32>
    %11 = tpu.matmul %5, %10, %cst_6 {dimension_numbers = #tpu.dot_dimension_numbers<[1], [0], [0], [1], [0, 0, 1, 1], [], []>} : vector<16x64xf32>, vector<64x128xf32>, vector<16x128xf32> -> vector<16x128xf32>
    %12 = arith.addf %8, %11 : vector<16x128xf32>
    %c0_7 = arith.constant 0 : index
    %c1 = arith.constant 1 : index
    %c0_8 = arith.constant 0 : index
    %c0_9 = arith.constant 0 : index
    %13 = vector.load %arg2[%c0_7, %c1, %c0_8, %c0_9] : memref<2x3x64x128xf32, #tpu.memory_space<vmem>>, vector<1x1x64x128xf32>
    %14 = vector.shape_cast %13 : vector<1x1x64x128xf32> to vector<64x128xf32>
    %cst_10 = arith.constant dense<0.000000e+00> : vector<16x128xf32>
    %15 = tpu.matmul %1, %14, %cst_10 {dimension_numbers = #tpu.dot_dimension_numbers<[1], [0], [0], [1], [0, 0, 1, 1], [], []>} : vector<16x64xf32>, vector<64x128xf32>, vector<16x128xf32> -> vector<16x128xf32>
    %16 = arith.addf %12, %15 : vector<16x128xf32>
    %c0_11 = arith.constant 0 : index
    %c2 = arith.constant 2 : index
    %c0_12 = arith.constant 0 : index
    %c0_13 = arith.constant 0 : index
    %17 = vector.load %arg2[%c0_11, %c2, %c0_12, %c0_13] : memref<2x3x64x128xf32, #tpu.memory_space<vmem>>, vector<1x1x64x128xf32>
    %18 = vector.shape_cast %17 : vector<1x1x64x128xf32> to vector<64x128xf32>
    %cst_14 = arith.constant dense<0.000000e+00> : vector<16x128xf32>
    %19 = tpu.matmul %7, %18, %cst_14 {dimension_numbers = #tpu.dot_dimension_numbers<[1], [0], [0], [1], [0, 0, 1, 1], [], []>} : vector<16x64xf32>, vector<64x128xf32>, vector<16x128xf32> -> vector<16x128xf32>
    %20 = arith.addf %16, %19 : vector<16x128xf32>
    %c0_15 = arith.constant 0 : index
    %c0_16 = arith.constant 0 : index
    %c0_17 = arith.constant 0 : index
    %21 = vector.load %arg3[%c0_15, %c0_16, %c0_17] : memref<2x1x128xf32, #tpu.memory_space<vmem>>, vector<1x1x128xf32>
    %22 = vector.shape_cast %21 : vector<1x1x128xf32> to vector<1x128xf32>
    %23 = vector.broadcast %22 : vector<1x128xf32> to vector<16x128xf32>
    %24 = arith.addf %20, %23 : vector<16x128xf32>
    %c0_18 = arith.constant 0 : index
    %c0_19 = arith.constant 0 : index
    %c0_20 = arith.constant 0 : index
    %c0_21 = arith.constant 0 : index
    %25 = vector.load %arg4[%c0_18, %c0_19, %c0_20, %c0_21] : memref<1x16x2x128xf32, #tpu.memory_space<vmem>>, vector<1x16x1x128xf32>
    %26 = vector.shape_cast %25 : vector<1x16x1x128xf32> to vector<16x128xf32>
    %27 = vector.shape_cast %24 : vector<16x128xf32> to vector<1x16x1x128xf32>
    tpu.vector_store %arg4[%c0_18, %c0_19, %c0_20, %c0_21], %27 {strides = array<i32>} : memref<1x16x2x128xf32, #tpu.memory_space<vmem>>, vector<1x16x1x128xf32>,
    %cst_22 = arith.constant 0.000000e+00 : f32
    %28 = vector.broadcast %cst_22 : f32 to vector<16x128xf32>
    %c1_23 = arith.constant 1 : index
    %c0_24 = arith.constant 0 : index
    %c0_25 = arith.constant 0 : index
    %c0_26 = arith.constant 0 : index
    %29 = vector.load %arg2[%c1_23, %c0_24, %c0_25, %c0_26] : memref<2x3x64x128xf32, #tpu.memory_space<vmem>>, vector<1x1x64x128xf32>
    %30 = vector.shape_cast %29 : vector<1x1x64x128xf32> to vector<64x128xf32>
    %cst_27 = arith.constant dense<0.000000e+00> : vector<16x128xf32>
    %31 = tpu.matmul %5, %30, %cst_27 {dimension_numbers = #tpu.dot_dimension_numbers<[1], [0], [0], [1], [0, 0, 1, 1], [], []>} : vector<16x64xf32>, vector<64x128xf32>, vector<16x128xf32> -> vector<16x128xf32>
    %32 = arith.addf %28, %31 : vector<16x128xf32>
    %c1_28 = arith.constant 1 : index
    %c1_29 = arith.constant 1 : index
    %c0_30 = arith.constant 0 : index
    %c0_31 = arith.constant 0 : index
    %33 = vector.load %arg2[%c1_28, %c1_29, %c0_30, %c0_31] : memref<2x3x64x128xf32, #tpu.memory_space<vmem>>, vector<1x1x64x128xf32>
    %34 = vector.shape_cast %33 : vector<1x1x64x128xf32> to vector<64x128xf32>
    %cst_32 = arith.constant dense<0.000000e+00> : vector<16x128xf32>
    %35 = tpu.matmul %1, %34, %cst_32 {dimension_numbers = #tpu.dot_dimension_numbers<[1], [0], [0], [1], [0, 0, 1, 1], [], []>} : vector<16x64xf32>, vector<64x128xf32>, vector<16x128xf32> -> vector<16x128xf32>
    %36 = arith.addf %32, %35 : vector<16x128xf32>
    %c1_33 = arith.constant 1 : index
    %c2_34 = arith.constant 2 : index
    %c0_35 = arith.constant 0 : index
    %c0_36 = arith.constant 0 : index
    %37 = vector.load %arg2[%c1_33, %c2_34, %c0_35, %c0_36] : memref<2x3x64x128xf32, #tpu.memory_space<vmem>>, vector<1x1x64x128xf32>
    %38 = vector.shape_cast %37 : vector<1x1x64x128xf32> to vector<64x128xf32>
    %cst_37 = arith.constant dense<0.000000e+00> : vector<16x128xf32>
    %39 = tpu.matmul %7, %38, %cst_37 {dimension_numbers = #tpu.dot_dimension_numbers<[1], [0], [0], [1], [0, 0, 1, 1], [], []>} : vector<16x64xf32>, vector<64x128xf32>, vector<16x128xf32> -> vector<16x128xf32>
    %40 = arith.addf %36, %39 : vector<16x128xf32>
    %c1_38 = arith.constant 1 : index
    %c0_39 = arith.constant 0 : index
    %c0_40 = arith.constant 0 : index
    %41 = vector.load %arg3[%c1_38, %c0_39, %c0_40] : memref<2x1x128xf32, #tpu.memory_space<vmem>>, vector<1x1x128xf32>
    %42 = vector.shape_cast %41 : vector<1x1x128xf32> to vector<1x128xf32>
    %43 = vector.broadcast %42 : vector<1x128xf32> to vector<16x128xf32>
    %44 = arith.addf %40, %43 : vector<16x128xf32>
    %c0_41 = arith.constant 0 : index
    %c0_42 = arith.constant 0 : index
    %c1_43 = arith.constant 1 : index
    %c0_44 = arith.constant 0 : index
    %45 = vector.load %arg4[%c0_41, %c0_42, %c1_43, %c0_44] : memref<1x16x2x128xf32, #tpu.memory_space<vmem>>, vector<1x16x1x128xf32>
    %46 = vector.shape_cast %45 : vector<1x16x1x128xf32> to vector<16x128xf32>
    %47 = vector.shape_cast %44 : vector<16x128xf32> to vector<1x16x1x128xf32>
    tpu.vector_store %arg4[%c0_41, %c0_42, %c1_43, %c0_44], %47 {strides = array<i32>} : memref<1x16x2x128xf32, #tpu.memory_space<vmem>>, vector<1x16x1x128xf32>,
    return
  }
  func.func @transform_0(%arg0: i32) -> (i32, i32, i32) {
    %c0_i32 = arith.constant 0 : i32
    %c0_i32_0 = arith.constant 0 : i32
    %c0_i32_1 = arith.constant 0 : i32
    return %arg0, %c0_i32, %c0_i32_0 : i32, i32, i32
  }
  func.func @transform_1(%arg0: i32) -> (i32, i32, i32, i32) {
    %c0_i32 = arith.constant 0 : i32
    %c0_i32_0 = arith.constant 0 : i32
    %c0_i32_1 = arith.constant 0 : i32
    %c0_i32_2 = arith.constant 0 : i32
    %c0_i32_3 = arith.constant 0 : i32
    return %c0_i32, %c0_i32_0, %c0_i32_1, %c0_i32_2 : i32, i32, i32, i32
  }
  func.func @transform_2(%arg0: i32) -> (i32, i32, i32) {
    %c0_i32 = arith.constant 0 : i32
    %c0_i32_0 = arith.constant 0 : i32
    %c0_i32_1 = arith.constant 0 : i32
    %c0_i32_2 = arith.constant 0 : i32
    return %c0_i32, %c0_i32_0, %c0_i32_1 : i32, i32, i32
  }
  func.func @transform_3(%arg0: i32) -> (i32, i32, i32, i32) {
    %c0_i32 = arith.constant 0 : i32
    %c0_i32_0 = arith.constant 0 : i32
    %c0_i32_1 = arith.constant 0 : i32
    %c0_i32_2 = arith.constant 0 : i32
    return %arg0, %c0_i32, %c0_i32_0, %c0_i32_1 : i32, i32, i32, i32
  }
}

</mosaic_0001>

<llo_original>
// kernel: tpu_custom_call.1
$region0: #{tpu_custom_call.1}
  #allocation0 [shape = 'u32[]', space=smem, size = 0x4, offset = 0x4, fixed_abs, tag = 'smem constant byte address 0x4 - core index']
  #allocation1 [shape = 'u32[144,128]{1,0:T(1,128)}', space=vmem, size = 0x12000, scoped, tag = 'internal scratch']
  %s0 = inlined_call_operand.hbm [shape: f32[2,16,64], index: 0, kind: input, shape index: {}]
  %s1 = inlined_call_operand.hbm [shape: f32[2,3,64,128], index: 1, kind: input, shape index: {}]
  %s2 = inlined_call_operand.vmem [shape: f32[2,1,128], index: 2, kind: input, shape index: {}]
  %s3 = inlined_call_operand.hbm [shape: f32[2,16,2,128], index: 3, kind: output, shape index: {}]
  %s4 = sld [smem:[#allocation0]]
  $region53: #{tpu_custom_call.1} parent=0
    _
  %s6 = ssub.s32 1, %s4
  %s7 = scalar_select 0, %s6, %s4
  $region1: #{tpu_custom_call.1} parent=0
    #allocation2 [shape = 'u8[16384]{0}', space=vmem, size = 0x4000, scoped, tag = 'input window, operand 0']
    #allocation3 [shape = 's32[2]{0}', space=sflag, size = 0x8, scoped, tag = 'scoped memory for tpu_custom_call.1']
    #allocation4 [shape = 's32[2]{0}', space=sflag, size = 0x8, scoped, tag = 'scoped memory for tpu_custom_call.1']
    #allocation5 [shape = 'u8[196608]{0}', space=vmem, size = 0x30000, scoped, tag = 'input window, operand 1, single buffered']
    #allocation6 [shape = 's32[1]{0}', space=sflag, size = 0x4, scoped, tag = 'scoped memory for tpu_custom_call.1']
    #allocation7 [shape = 'u8[32768]{0}', space=vmem, size = 0x8000, scoped, tag = 'output window, operand 0']
    %8 = vsyncpa [#allocation3], 0
    %s9 = scalar_lea.sflag [#allocation3], 1
    %10 = vsyncpa %s9, 0
    %11 = vsyncpa [#allocation6], 0
    %12 = vsyncpa [#allocation4], 0
    %s13 = scalar_lea.sflag [#allocation4], 1
    %14 = vsyncpa %s13, 0
    loop: start=0, step=1, limit=4
    $region2: #{tpu_custom_call.1} parent=1 // loop_pre_header
      _
    $region3: #{tpu_custom_call.1} parent=1 // loop_header
      %s16 = sphi 0, %s20
      %p17 = scmp.ge.s32.totalorder %s16, 4
      %s26 = sphi 0, %s28
      %s29 = sphi 0, %s26
      %s30 = sphi 0, %s29
      %s46 = sphi 0, %s30
      %s50 = sphi 0, %s50
      %s52 = sphi 0, %s50
      %s53 = sphi 0, %s52
      %s67 = sphi 0, %s53
      %s71 = sphi 0, %s71
      %s73 = sphi 0, %s71
      %s74 = sphi 0, %s73
      %s88 = sphi 0, %s74
      %s94 = sphi 0, %s96
      %s97 = sphi 0, %s94
      %s98 = sphi 0, %s97
      %s114 = sphi 0, %s98
    $region4: #{tpu_custom_call.1} parent=1 // loop_header_branch
      %19 = sbr.rel (%p17) target = $region8
    $region5: #{tpu_custom_call.1} parent=1 // loop_body
      %s21 = ssub.s32 %s16, 1
      %s22 = ssub.s32 %s16, 2
      %s23 = sadd.s32 %s16, 1
      %s24 = ssub.s32 %s16, %s23
      %p25 = scmp.eq.s32.totalorder %s24, 0
      %s27 = sadd.s32 %s26, 1
      %s28 = scalar_select %p25, %s26, %s27
      %p31 = pneg %p25
      %p32 = scmp.eq.s32.totalorder %s16, 1
      %p33 = por %p31, %p32
      %p34 = scmp.ne.s32.totalorder %s26, %s29
      %p35 = scmp.eq.s32.totalorder %s16, 0
      %p36 = por %p34, %p35
      %p37 = scmp.ne.s32.totalorder %s26, %s29
      %p38 = scmp.eq.s32.totalorder %s21, 1
      %p39 = por %p37, %p38
      %p40 = scmp.ne.s32.totalorder %s29, %s30
      %p41 = scmp.eq.s32.totalorder %s21, 0
      %p42 = por %p40, %p41
      %p43 = scmp.ne.s32.totalorder %s29, %s30
      %p44 = scmp.eq.s32.totalorder %s22, 1
      %p45 = por %p43, %p44
      %p47 = scmp.ne.s32.totalorder %s30, %s46
      %p48 = scmp.eq.s32.totalorder %s22, 0
      %p49 = por %p47, %p48
      %s51 = sadd.s32 %s50, 1
      %p54 = scmp.eq.s32.totalorder %s16, 1
      %p55 = scmp.ne.s32.totalorder %s50, %s52
      %p56 = scmp.eq.s32.totalorder %s16, 0
      %p57 = por %p55, %p56
      %p58 = scmp.ne.s32.totalorder %s50, %s52
      %p59 = scmp.eq.s32.totalorder %s21, 1
      %p60 = por %p58, %p59
      %p61 = scmp.ne.s32.totalorder %s52, %s53
      %p62 = scmp.eq.s32.totalorder %s21, 0
      %p63 = por %p61, %p62
      %p64 = scmp.ne.s32.totalorder %s52, %s53
      %p65 = scmp.eq.s32.totalorder %s22, 1
      %p66 = por %p64, %p65
      %p68 = scmp.ne.s32.totalorder %s53, %s67
      %p69 = scmp.eq.s32.totalorder %s22, 0
      %p70 = por %p68, %p69
      %s72 = sadd.s32 %s71, 1
      %p75 = scmp.eq.s32.totalorder %s16, 1
      %p76 = scmp.ne.s32.totalorder %s71, %s73
      %p77 = scmp.eq.s32.totalorder %s16, 0
      %p78 = por %p76, %p77
      %p79 = scmp.ne.s32.totalorder %s71, %s73
      %p80 = scmp.eq.s32.totalorder %s21, 1
      %p81 = por %p79, %p80
      %p82 = scmp.ne.s32.totalorder %s73, %s74
      %p83 = scmp.eq.s32.totalorder %s21, 0
      %p84 = por %p82, %p83
      %p85 = scmp.ne.s32.totalorder %s73, %s74
      %p86 = scmp.eq.s32.totalorder %s22, 1
      %p87 = por %p85, %p86
      %p89 = scmp.ne.s32.totalorder %s74, %s88
      %p90 = scmp.eq.s32.totalorder %s22, 0
      %p91 = por %p89, %p90
      %s92 = ssub.s32 %s16, %s23
      %p93 = scmp.eq.s32.totalorder %s92, 0
      %s95 = sadd.s32 %s94, 1
      %s96 = scalar_select %p93, %s94, %s95
      %p99 = pneg %p93
      %p100 = scmp.eq.s32.totalorder %s16, 1
      %p101 = por %p99, %p100
      %p102 = scmp.ne.s32.totalorder %s94, %s97
      %p103 = scmp.eq.s32.totalorder %s16, 0
      %p104 = por %p102, %p103
      %p105 = scmp.ne.s32.totalorder %s94, %s97
      %p106 = scmp.eq.s32.totalorder %s21, 1
      %p107 = por %p105, %p106
      %p108 = scmp.ne.s32.totalorder %s97, %s98
      %p109 = scmp.eq.s32.totalorder %s21, 0
      %p110 = por %p108, %p109
      %p111 = scmp.ne.s32.totalorder %s97, %s98
      %p112 = scmp.eq.s32.totalorder %s22, 1
      %p113 = por %p111, %p112
      %p115 = scmp.ne.s32.totalorder %s98, %s114
      %p116 = scmp.eq.s32.totalorder %s22, 0
      %p117 = por %p115, %p116
      %p118 = scmp.le.s32.totalorder 1, %s16
      %p119 = scmp.lt.s32.totalorder %s16, 3
      %p120 = pnand %p118, %p119
      %p121 = pneg %p120
      // Predicated region
      $region9: #{tpu_custom_call.1} parent=5 // pred_check
        _
      $region10: #{tpu_custom_call.1} parent=5 // pred_check_branch
        %123 = sbr.rel (%p120) target = $region12
      $region11: #{tpu_custom_call.1} parent=5 // pred_region
        %s124 = ssub.s32 %s16, 1
        // Predicated region
        $region13: #{tpu_custom_call.1} parent=11 // pred_check
          %p125 = pneg %p63
        $region14: #{tpu_custom_call.1} parent=11 // pred_check_branch
          %127 = sbr.rel (%p125) target = $region16
        $region15: #{tpu_custom_call.1} parent=11 // pred_region
          %s129 = ssub.s32 6144, 6144
          %130 = vsyncadd [#allocation6], %s129
          %s131 = sshll.u32 [#allocation5], 4
          %s132 = int_to_ptr.vmem [resolvable:$true] %s131
          %137 = dma.hbm_to_vmem [thread:$0]  %s1, 6144, %s132, [#allocation6], 128, 128, 8
        $region16: #{tpu_custom_call.1} parent=11 // pred_fallthru
          _
        // Predicated region
        $region17: #{tpu_custom_call.1} parent=11 // pred_check
          %p138 = pneg %p84
        $region18: #{tpu_custom_call.1} parent=11 // pred_check_branch
          %140 = sbr.rel (%p138) target = $region20
        $region19: #{tpu_custom_call.1} parent=11 // pred_region
          _
        $region20: #{tpu_custom_call.1} parent=11 // pred_fallthru
          _
      $region12: #{tpu_custom_call.1} parent=5 // pred_fallthru
        _
      %p141 = scmp.lt.s32.totalorder %s16, 2
      // Predicated region
      $region21: #{tpu_custom_call.1} parent=5 // pred_check
        %p142 = pneg %p141
      $region22: #{tpu_custom_call.1} parent=5 // pred_check_branch
        %144 = sbr.rel (%p142) target = $region24
      $region23: #{tpu_custom_call.1} parent=5 // pred_region
        // Predicated region
        $region25: #{tpu_custom_call.1} parent=23 // pred_check
          %p145 = pneg %p36
        $region26: #{tpu_custom_call.1} parent=23 // pred_check_branch
          %147 = sbr.rel (%p145) target = $region28
        $region27: #{tpu_custom_call.1} parent=23 // pred_region
          %s148 = sand.u32 %s26, 1
          %s149 = scalar_lea.sflag [#allocation3], %s148
          %s150 = sand.u32 %s26, 1
          %s151 = smul.addr %s150, 16
          %s152 = scalar_lea.vmem [#allocation2], %s151
          %s154 = ssub.s32 256, 256
          %155 = vsyncadd %s149, %s154
          %s156 = smul.addr %s16, 2
          %s157 = smul.addr %s156, 128
          %s158 = scalar_lea.hbm %s0, %s157
          %s159 = sshll.u32 %s152, 4
          %s160 = int_to_ptr.vmem [resolvable:$true] %s159
          %165 = dma.hbm_to_vmem [thread:$0]  %s158, 256, %s160, %s149, 128, 128, 8
        $region28: #{tpu_custom_call.1} parent=23 // pred_fallthru
          _
      $region24: #{tpu_custom_call.1} parent=5 // pred_fallthru
        _
      %p166 = scmp.le.s32.totalorder 1, %s16
      %p167 = scmp.lt.s32.totalorder %s16, 3
      %p168 = pnand %p166, %p167
      %p169 = pneg %p168
      // Predicated region
      $region29: #{tpu_custom_call.1} parent=5 // pred_check
        _
      $region30: #{tpu_custom_call.1} parent=5 // pred_check_branch
        %171 = sbr.rel (%p168) target = $region32
      $region31: #{tpu_custom_call.1} parent=5 // pred_region
        %s172 = ssub.s32 %s16, 1
        %s173 = sand.u32 %s29, 1
        %s174 = scalar_lea.sflag [#allocation3], %s173
        %s175 = sand.u32 %s29, 1
        %s176 = smul.addr %s175, 16
        %s177 = scalar_lea.vmem [#allocation2], %s176
        // Predicated region
        $region33: #{tpu_custom_call.1} parent=31 // pred_check
          %p178 = pneg %p42
        $region34: #{tpu_custom_call.1} parent=31 // pred_check_branch
          %180 = sbr.rel (%p178) target = $region36
        $region35: #{tpu_custom_call.1} parent=31 // pred_region
          %181 = dma.done %s174, 256
        $region36: #{tpu_custom_call.1} parent=31 // pred_fallthru
          _
        // Predicated region
        $region37: #{tpu_custom_call.1} parent=31 // pred_check
          %p182 = pneg %p63
        $region38: #{tpu_custom_call.1} parent=31 // pred_check_branch
          %184 = sbr.rel (%p182) target = $region40
        $region39: #{tpu_custom_call.1} parent=31 // pred_region
          %185 = dma.done [#allocation6], 6144
        $region40: #{tpu_custom_call.1} parent=31 // pred_fallthru
          _
        %s186 = sand.u32 %s29, 1
        %s187 = scalar_lea.sflag [#allocation3], %s186
        %s188 = sand.u32 %s29, 1
        %s189 = smul.addr %s188, 16
        %s190 = scalar_lea.vmem [#allocation2], %s189
        %p191 = pneg %p42
        %p192 = pneg %p39
        %p193 = pneg %p63
        %p194 = pneg %p60
        %p195 = pneg %p84
        %p196 = pneg %p81
        %p197 = pneg %p110
        %p198 = pneg %p107
        %s199 = sand.u32 %s97, 1
        %s200 = scalar_lea.sflag [#allocation4], %s199
        %s201 = sand.u32 %s97, 1
        %s202 = smul.addr %s201, 32
        %s203 = scalar_lea.vmem [#allocation7], %s202
        %v204 = vld [vmem:[%s177] sm:$0xff]
        %v205 = vld [vmem:[%s177 + $0x8] sm:$0xff]
        %v207 = vrot.slane %v204, 1
        %vm210 = vcmask 1040384
        %v211 = vrot.slane %v204, 7
        %v212 = vrot.slane %v205, 7
        %v213 = vsel %vm210, %v211, %v212
        %v215 = vsel %vm210, %v207, %v211
        %vm216 = vcmask 1046528
        %v217 = vrot.slane %v205, 1
        %v218 = vsel %vm216, %v207, %v217
        %v221 = vsel %vm216, %v217, %v212
        %v222 = vld [vmem:[#allocation5] sm:$0xff]
        %v223 = vld [vmem:[#allocation5 + $0x8] sm:$0xff]
        %v224 = vld [vmem:[#allocation5 + $0x10] sm:$0xff]
        %v225 = vld [vmem:[#allocation5 + $0x18] sm:$0xff]
        %v226 = vld [vmem:[#allocation5 + $0x20] sm:$0xff]
        %v227 = vld [vmem:[#allocation5 + $0x28] sm:$0xff]
        %v228 = vld [vmem:[#allocation5 + $0x30] sm:$0xff]
        %v229 = vld [vmem:[#allocation5 + $0x38] sm:$0xff]
        %s230 = scalar_lea.vmem [#allocation5], 64
        %v231 = vld [vmem:[%s230] sm:$0xff]
        %v232 = vld [vmem:[%s230 + $0x8] sm:$0xff]
        %v233 = vld [vmem:[%s230 + $0x10] sm:$0xff]
        %v234 = vld [vmem:[%s230 + $0x18] sm:$0xff]
        %v235 = vld [vmem:[%s230 + $0x20] sm:$0xff]
        %v236 = vld [vmem:[%s230 + $0x28] sm:$0xff]
        %v237 = vld [vmem:[%s230 + $0x30] sm:$0xff]
        %v238 = vld [vmem:[%s230 + $0x38] sm:$0xff]
        %vm239 = vcmask 523264
        %v240 = vsel %vm239, %v204, 0
        %v242 = vsel %vm239, %v205, 0
        %244 = vmatprep.subr.mxu0 0.0
        %245 = vmatpush1.msra.mxu0 0.0
        %246 = vmatprep.subr.mxu0 0.0
        %247 = vmatpush1.msra.mxu0 0.0
        %248 = vmatprep.subr.mxu0 0.0
        %249 = vmatpush1.msra.mxu0 0.0
        %250 = vmatprep.subr.mxu0 0.0
        %251 = vmatpush1.msra.mxu0 0.0
        %252 = vmatprep.subr.mxu0 0.0
        %253 = vmatpush1.msra.mxu0 0.0
        %254 = vmatprep.subr.mxu0 0.0
        %255 = vmatpush1.msra.mxu0 0.0
        %256 = vmatprep.subr.mxu0 0.0
        %257 = vmatpush1.msra.mxu0 0.0
        %258 = vmatprep.subr.mxu0 0.0
        %259 = vmatpush1.msra.mxu0 0.0
        %260 = vmatprep.subr.mxu0 0.0
        %261 = vmatpush1.msra.mxu0 %v238
        %262 = vmatprep.subr.mxu0 0.0
        %263 = vmatpush1.msra.mxu0 %v237
        %264 = vmatprep.subr.mxu0 0.0
        %265 = vmatpush1.msra.mxu0 %v236
        %266 = vmatprep.subr.mxu0 0.0
        %267 = vmatpush1.msra.mxu0 %v235
        %268 = vmatprep.subr.mxu0 0.0
        %269 = vmatpush1.msra.mxu0 %v234
        %270 = vmatprep.subr.mxu0 0.0
        %271 = vmatpush1.msra.mxu0 %v233
        %272 = vmatprep.subr.mxu0 0.0
        %273 = vmatpush1.msra.mxu0 %v232
        %274 = vmatprep.subr.mxu0 0.0
        %275 = vmatpush1.msra.mxu0 %v231
        %276 = vmatprep.subr.mxu0 0.0
        %277 = vmatpush2.msra.mxu0 0.0
        %278 = vmatprep.subr.mxu0 0.0
        %279 = vmatpush2.msra.mxu0 0.0
        %280 = vmatprep.subr.mxu0 0.0
        %281 = vmatpush2.msra.mxu0 0.0
        %282 = vmatprep.subr.mxu0 0.0
        %283 = vmatpush2.msra.mxu0 0.0
        %284 = vmatprep.subr.mxu0 0.0
        %285 = vmatpush2.msra.mxu0 0.0
        %286 = vmatprep.subr.mxu0 0.0
        %287 = vmatpush2.msra.mxu0 0.0
        %288 = vmatprep.subr.mxu0 0.0
        %289 = vmatpush2.msra.mxu0 0.0
        %290 = vmatprep.subr.mxu0 0.0
        %291 = vmatpush2.msra.mxu0 0.0
        %292 = vmatprep.subr.mxu0 0.0
        %293 = vmatpush2.msra.mxu0 0.0
        %294 = vmatprep.subr.mxu0 0.0
        %295 = vmatpush2.msra.mxu0 0.0
        %296 = vmatprep.subr.mxu0 0.0
        %297 = vmatpush2.msra.mxu0 0.0
        %298 = vmatprep.subr.mxu0 0.0
        %299 = vmatpush2.msra.mxu0 0.0
        %300 = vmatprep.subr.mxu0 0.0
        %301 = vmatpush2.msra.mxu0 0.0
        %302 = vmatprep.subr.mxu0 0.0
        %303 = vmatpush2.msra.mxu0 0.0
        %304 = vmatprep.subr.mxu0 0.0
        %305 = vmatpush2.msra.mxu0 0.0
        %306 = vmatprep.subr.mxu0 0.0
        %307 = vmatpush2.msra.mxu0 0.0
        %308 = vmatprep.mubr.f32.mxu0 0.0
        %309 = vmatmul.mubr.f32.gmra.mxu0 %v240
        %v310 = vpop.f32.mrf.mxu0
        %v311 = vadd.f32 0.0, %v310
        %v312 = vpop.f32.mrf.mxu0
        %313 = vmatprep.mubr.f32.mxu0 0.0
        %314 = vmatmul.mubr.f32.gmra.mxu0 %v242
        %v315 = vpop.f32.mrf.mxu0
        %v316 = vadd.f32 0.0, %v315
        %v317 = vpop.f32.mrf.mxu0
        %318 = vdwg.mxu0
        %v320 = vsel %vm239, %v215, 0
        %v322 = vsel %vm239, %v213, 0
        %324 = vmatprep.subr.mxu0 0.0
        %325 = vmatpush1.msra.mxu0 0.0
        %326 = vmatprep.subr.mxu0 0.0
        %327 = vmatpush1.msra.mxu0 0.0
        %328 = vmatprep.subr.mxu0 0.0
        %329 = vmatpush1.msra.mxu0 0.0
        %330 = vmatprep.subr.mxu0 0.0
        %331 = vmatpush1.msra.mxu0 0.0
        %332 = vmatprep.subr.mxu0 0.0
        %333 = vmatpush1.msra.mxu0 0.0
        %334 = vmatprep.subr.mxu0 0.0
        %335 = vmatpush1.msra.mxu0 0.0
        %336 = vmatprep.subr.mxu0 0.0
        %337 = vmatpush1.msra.mxu0 0.0
        %338 = vmatprep.subr.mxu0 0.0
        %339 = vmatpush1.msra.mxu0 0.0
        %340 = vmatprep.subr.mxu0 0.0
        %341 = vmatpush1.msra.mxu0 %v229
        %342 = vmatprep.subr.mxu0 0.0
        %343 = vmatpush1.msra.mxu0 %v228
        %344 = vmatprep.subr.mxu0 0.0
        %345 = vmatpush1.msra.mxu0 %v227
        %346 = vmatprep.subr.mxu0 0.0
        %347 = vmatpush1.msra.mxu0 %v226
        %348 = vmatprep.subr.mxu0 0.0
        %349 = vmatpush1.msra.mxu0 %v225
        %350 = vmatprep.subr.mxu0 0.0
        %351 = vmatpush1.msra.mxu0 %v224
        %352 = vmatprep.subr.mxu0 0.0
        %353 = vmatpush1.msra.mxu0 %v223
        %354 = vmatprep.subr.mxu0 0.0
        %355 = vmatpush1.msra.mxu0 %v222
        %356 = vmatprep.subr.mxu0 0.0
        %357 = vmatpush2.msra.mxu0 0.0
        %358 = vmatprep.subr.mxu0 0.0
        %359 = vmatpush2.msra.mxu0 0.0
        %360 = vmatprep.subr.mxu0 0.0
        %361 = vmatpush2.msra.mxu0 0.0
        %362 = vmatprep.subr.mxu0 0.0
        %363 = vmatpush2.msra.mxu0 0.0
        %364 = vmatprep.subr.mxu0 0.0
        %365 = vmatpush2.msra.mxu0 0.0
        %366 = vmatprep.subr.mxu0 0.0
        %367 = vmatpush2.msra.mxu0 0.0
        %368 = vmatprep.subr.mxu0 0.0
        %369 = vmatpush2.msra.mxu0 0.0
        %370 = vmatprep.subr.mxu0 0.0
        %371 = vmatpush2.msra.mxu0 0.0
        %372 = vmatprep.subr.mxu0 0.0
        %373 = vmatpush2.msra.mxu0 0.0
        %374 = vmatprep.subr.mxu0 0.0
        %375 = vmatpush2.msra.mxu0 0.0
        %376 = vmatprep.subr.mxu0 0.0
        %377 = vmatpush2.msra.mxu0 0.0
        %378 = vmatprep.subr.mxu0 0.0
        %379 = vmatpush2.msra.mxu0 0.0
        %380 = vmatprep.subr.mxu0 0.0
        %381 = vmatpush2.msra.mxu0 0.0
        %382 = vmatprep.subr.mxu0 0.0
        %383 = vmatpush2.msra.mxu0 0.0
        %384 = vmatprep.subr.mxu0 0.0
        %385 = vmatpush2.msra.mxu0 0.0
        %386 = vmatprep.subr.mxu0 0.0
        %387 = vmatpush2.msra.mxu0 0.0
        %388 = vmatprep.mubr.f32.mxu0 0.0
        %389 = vmatmul.mubr.f32.gmra.mxu0 %v320
        %v390 = vpop.f32.mrf.mxu0
        %v391 = vadd.f32 %v311, %v390
        %v392 = vpop.f32.mrf.mxu0
        %393 = vmatprep.mubr.f32.mxu0 0.0
        %394 = vmatmul.mubr.f32.gmra.mxu0 %v322
        %v395 = vpop.f32.mrf.mxu0
        %v396 = vadd.f32 %v316, %v395
        %v397 = vpop.f32.mrf.mxu0
        %398 = vdwg.mxu0
        %s399 = scalar_lea.vmem [#allocation5], 128
        %v400 = vld [vmem:[%s399] sm:$0xff]
        %v401 = vld [vmem:[%s399 + $0x8] sm:$0xff]
        %v402 = vld [vmem:[%s399 + $0x10] sm:$0xff]
        %v403 = vld [vmem:[%s399 + $0x18] sm:$0xff]
        %v404 = vld [vmem:[%s399 + $0x20] sm:$0xff]
        %v405 = vld [vmem:[%s399 + $0x28] sm:$0xff]
        %v406 = vld [vmem:[%s399 + $0x30] sm:$0xff]
        %v407 = vld [vmem:[%s399 + $0x38] sm:$0xff]
        %v408 = vsel %vm239, %v218, 0
        %v411 = vsel %vm239, %v221, 0
        %413 = vmatprep.subr.mxu0 0.0
        %414 = vmatpush1.msra.mxu0 0.0
        %415 = vmatprep.subr.mxu0 0.0
        %416 = vmatpush1.msra.mxu0 0.0
        %417 = vmatprep.subr.mxu0 0.0
        %418 = vmatpush1.msra.mxu0 0.0
        %419 = vmatprep.subr.mxu0 0.0
        %420 = vmatpush1.msra.mxu0 0.0
        %421 = vmatprep.subr.mxu0 0.0
        %422 = vmatpush1.msra.mxu0 0.0
        %423 = vmatprep.subr.mxu0 0.0
        %424 = vmatpush1.msra.mxu0 0.0
        %425 = vmatprep.subr.mxu0 0.0
        %426 = vmatpush1.msra.mxu0 0.0
        %427 = vmatprep.subr.mxu0 0.0
        %428 = vmatpush1.msra.mxu0 0.0
        %429 = vmatprep.subr.mxu0 0.0
        %430 = vmatpush1.msra.mxu0 %v407
        %431 = vmatprep.subr.mxu0 0.0
        %432 = vmatpush1.msra.mxu0 %v406
        %433 = vmatprep.subr.mxu0 0.0
        %434 = vmatpush1.msra.mxu0 %v405
        %435 = vmatprep.subr.mxu0 0.0
        %436 = vmatpush1.msra.mxu0 %v404
        %437 = vmatprep.subr.mxu0 0.0
        %438 = vmatpush1.msra.mxu0 %v403
        %439 = vmatprep.subr.mxu0 0.0
        %440 = vmatpush1.msra.mxu0 %v402
        %441 = vmatprep.subr.mxu0 0.0
        %442 = vmatpush1.msra.mxu0 %v401
        %443 = vmatprep.subr.mxu0 0.0
        %444 = vmatpush1.msra.mxu0 %v400
        %445 = vmatprep.subr.mxu0 0.0
        %446 = vmatpush2.msra.mxu0 0.0
        %447 = vmatprep.subr.mxu0 0.0
        %448 = vmatpush2.msra.mxu0 0.0
        %449 = vmatprep.subr.mxu0 0.0
        %450 = vmatpush2.msra.mxu0 0.0
        %451 = vmatprep.subr.mxu0 0.0
        %452 = vmatpush2.msra.mxu0 0.0
        %453 = vmatprep.subr.mxu0 0.0
        %454 = vmatpush2.msra.mxu0 0.0
        %455 = vmatprep.subr.mxu0 0.0
        %456 = vmatpush2.msra.mxu0 0.0
        %457 = vmatprep.subr.mxu0 0.0
        %458 = vmatpush2.msra.mxu0 0.0
        %459 = vmatprep.subr.mxu0 0.0
        %460 = vmatpush2.msra.mxu0 0.0
        %461 = vmatprep.subr.mxu0 0.0
        %462 = vmatpush2.msra.mxu0 0.0
        %463 = vmatprep.subr.mxu0 0.0
        %464 = vmatpush2.msra.mxu0 0.0
        %465 = vmatprep.subr.mxu0 0.0
        %466 = vmatpush2.msra.mxu0 0.0
        %467 = vmatprep.subr.mxu0 0.0
        %468 = vmatpush2.msra.mxu0 0.0
        %469 = vmatprep.subr.mxu0 0.0
        %470 = vmatpush2.msra.mxu0 0.0
        %471 = vmatprep.subr.mxu0 0.0
        %472 = vmatpush2.msra.mxu0 0.0
        %473 = vmatprep.subr.mxu0 0.0
        %474 = vmatpush2.msra.mxu0 0.0
        %475 = vmatprep.subr.mxu0 0.0
        %476 = vmatpush2.msra.mxu0 0.0
        %477 = vmatprep.mubr.f32.mxu0 0.0
        %478 = vmatmul.mubr.f32.gmra.mxu0 %v408
        %v479 = vpop.f32.mrf.mxu0
        %v480 = vadd.f32 0.0, %v479
        %v481 = vpop.f32.mrf.mxu0
        %482 = vmatprep.mubr.f32.mxu0 0.0
        %483 = vmatmul.mubr.f32.gmra.mxu0 %v411
        %v484 = vpop.f32.mrf.mxu0
        %v485 = vadd.f32 0.0, %v484
        %v486 = vpop.f32.mrf.mxu0
        %487 = vdwg.mxu0
        %v488 = vadd.f32 %v391, %v480
        %v489 = vadd.f32 %v396, %v485
        %v490 = vld [vmem:[%s2] sm:$0x1]
        %v492 = vlaneseq
        %v493 = vshrl.u32 %v492, 7
        %v494 = vsub.s32 0, %v493
        %v495 = vrot.slane %v490, %v494
        %v497 = vadd.f32 %v488, %v495
        %v498 = vadd.f32 %v489, %v495
        %v501 = vcombine.high %v497, %v497
        %v503 = vunpack.c.l.s4 1966171168
        %v504 = vunpack.c.0.s8 %v503
        %v505 = vlaneseq
        %v506 = vshrl.u32 %v505, 7
        %v507 = vsub.s32 %v504, %v506
        %v508 = vrot.slane %v497, %v507
        %v510 = vunpack.c.l.s4 1966171168
        %v511 = vunpack.c.0.s8 %v510
        %v512 = vlaneseq
        %v513 = vshrl.u32 %v512, 7
        %v514 = vsub.s32 %v511, %v513
        %v515 = vrot.slane %v501, %v514
        %v516 = vcombine.high %v508, %v508
        %v517 = vcombine.high %v515, %v515
        %v519 = vunpack.c.l.s4 1966171168
        %v520 = vunpack.c.0.s8 %v519
        %v521 = vlaneseq
        %v522 = vshrl.u32 %v521, 7
        %v523 = vsub.s32 %v520, %v522
        %v524 = vrot.slane %v508, %v523
        %v526 = vunpack.c.l.s4 1966171168
        %v527 = vunpack.c.0.s8 %v526
        %v528 = vlaneseq
        %v529 = vshrl.u32 %v528, 7
        %v530 = vsub.s32 %v527, %v529
        %v531 = vrot.slane %v515, %v530
        %v533 = vunpack.c.l.s4 1966171168
        %v534 = vunpack.c.0.s8 %v533
        %v535 = vlaneseq
        %v536 = vshrl.u32 %v535, 7
        %v537 = vsub.s32 %v534, %v536
        %v538 = vrot.slane %v516, %v537
        %v540 = vunpack.c.l.s4 1966171168
        %v541 = vunpack.c.0.s8 %v540
        %v542 = vlaneseq
        %v543 = vshrl.u32 %v542, 7
        %v544 = vsub.s32 %v541, %v543
        %v545 = vrot.slane %v517, %v544
        %v546 = vcombine.high %v524, %v524
        %v547 = vcombine.high %v531, %v531
        %v548 = vcombine.high %v538, %v538
        %v549 = vcombine.high %v545, %v545
        %v550 = vcombine.high %v498, %v498
        %v552 = vunpack.c.l.s4 1966171168
        %v553 = vunpack.c.0.s8 %v552
        %v554 = vlaneseq
        %v555 = vshrl.u32 %v554, 7
        %v556 = vsub.s32 %v553, %v555
        %v557 = vrot.slane %v498, %v556
        %v559 = vunpack.c.l.s4 1966171168
        %v560 = vunpack.c.0.s8 %v559
        %v561 = vlaneseq
        %v562 = vshrl.u32 %v561, 7
        %v563 = vsub.s32 %v560, %v562
        %v564 = vrot.slane %v550, %v563
        %v565 = vcombine.high %v557, %v557
        %v566 = vcombine.high %v564, %v564
        %v568 = vunpack.c.l.s4 1966171168
        %v569 = vunpack.c.0.s8 %v568
        %v570 = vlaneseq
        %v571 = vshrl.u32 %v570, 7
        %v572 = vsub.s32 %v569, %v571
        %v573 = vrot.slane %v557, %v572
        %v575 = vunpack.c.l.s4 1966171168
        %v576 = vunpack.c.0.s8 %v575
        %v577 = vlaneseq
        %v578 = vshrl.u32 %v577, 7
        %v579 = vsub.s32 %v576, %v578
        %v580 = vrot.slane %v564, %v579
        %v582 = vunpack.c.l.s4 1966171168
        %v583 = vunpack.c.0.s8 %v582
        %v584 = vlaneseq
        %v585 = vshrl.u32 %v584, 7
        %v586 = vsub.s32 %v583, %v585
        %v587 = vrot.slane %v565, %v586
        %v589 = vunpack.c.l.s4 1966171168
        %v590 = vunpack.c.0.s8 %v589
        %v591 = vlaneseq
        %v592 = vshrl.u32 %v591, 7
        %v593 = vsub.s32 %v590, %v592
        %v594 = vrot.slane %v566, %v593
        %v595 = vcombine.high %v573, %v573
        %v596 = vcombine.high %v580, %v580
        %v597 = vcombine.high %v587, %v587
        %v598 = vcombine.high %v594, %v594
        %615 = vst [vmem:[%s203] sm:$0x1] %v524
        %616 = vst [vmem:[%s203 + $0x2] sm:$0x1] %v538
        %617 = vst [vmem:[%s203 + $0x4] sm:$0x1] %v546
        %618 = vst [vmem:[%s203 + $0x6] sm:$0x1] %v548
        %619 = vst [vmem:[%s203 + $0x8] sm:$0x1] %v531
        %620 = vst [vmem:[%s203 + $0xa] sm:$0x1] %v545
        %621 = vst [vmem:[%s203 + $0xc] sm:$0x1] %v547
        %622 = vst [vmem:[%s203 + $0xe] sm:$0x1] %v549
        %623 = vst [vmem:[%s203 + $0x10] sm:$0x1] %v573
        %624 = vst [vmem:[%s203 + $0x12] sm:$0x1] %v587
        %625 = vst [vmem:[%s203 + $0x14] sm:$0x1] %v595
        %626 = vst [vmem:[%s203 + $0x16] sm:$0x1] %v597
        %627 = vst [vmem:[%s203 + $0x18] sm:$0x1] %v580
        %628 = vst [vmem:[%s203 + $0x1a] sm:$0x1] %v594
        %629 = vst [vmem:[%s203 + $0x1c] sm:$0x1] %v596
        %630 = vst [vmem:[%s203 + $0x1e] sm:$0x1] %v598
        %s631 = scalar_lea.vmem [#allocation5], 192
        %v632 = vld [vmem:[%s631] sm:$0xff]
        %v633 = vld [vmem:[%s631 + $0x8] sm:$0xff]
        %v634 = vld [vmem:[%s631 + $0x10] sm:$0xff]
        %v635 = vld [vmem:[%s631 + $0x18] sm:$0xff]
        %v636 = vld [vmem:[%s631 + $0x20] sm:$0xff]
        %v637 = vld [vmem:[%s631 + $0x28] sm:$0xff]
        %v638 = vld [vmem:[%s631 + $0x30] sm:$0xff]
        %v639 = vld [vmem:[%s631 + $0x38] sm:$0xff]
        %s640 = scalar_lea.vmem [#allocation5], 256
        %v641 = vld [vmem:[%s640] sm:$0xff]
        %v642 = vld [vmem:[%s640 + $0x8] sm:$0xff]
        %v643 = vld [vmem:[%s640 + $0x10] sm:$0xff]
        %v644 = vld [vmem:[%s640 + $0x18] sm:$0xff]
        %v645 = vld [vmem:[%s640 + $0x20] sm:$0xff]
        %v646 = vld [vmem:[%s640 + $0x28] sm:$0xff]
        %v647 = vld [vmem:[%s640 + $0x30] sm:$0xff]
        %v648 = vld [vmem:[%s640 + $0x38] sm:$0xff]
        %649 = vmatprep.subr.mxu0 0.0
        %650 = vmatpush1.msra.mxu0 0.0
        %651 = vmatprep.subr.mxu0 0.0
        %652 = vmatpush1.msra.mxu0 0.0
        %653 = vmatprep.subr.mxu0 0.0
        %654 = vmatpush1.msra.mxu0 0.0
        %655 = vmatprep.subr.mxu0 0.0
        %656 = vmatpush1.msra.mxu0 0.0
        %657 = vmatprep.subr.mxu0 0.0
        %658 = vmatpush1.msra.mxu0 0.0
        %659 = vmatprep.subr.mxu0 0.0
        %660 = vmatpush1.msra.mxu0 0.0
        %661 = vmatprep.subr.mxu0 0.0
        %662 = vmatpush1.msra.mxu0 0.0
        %663 = vmatprep.subr.mxu0 0.0
        %664 = vmatpush1.msra.mxu0 0.0
        %665 = vmatprep.subr.mxu0 0.0
        %666 = vmatpush1.msra.mxu0 %v648
        %667 = vmatprep.subr.mxu0 0.0
        %668 = vmatpush1.msra.mxu0 %v647
        %669 = vmatprep.subr.mxu0 0.0
        %670 = vmatpush1.msra.mxu0 %v646
        %671 = vmatprep.subr.mxu0 0.0
        %672 = vmatpush1.msra.mxu0 %v645
        %673 = vmatprep.subr.mxu0 0.0
        %674 = vmatpush1.msra.mxu0 %v644
        %675 = vmatprep.subr.mxu0 0.0
        %676 = vmatpush1.msra.mxu0 %v643
        %677 = vmatprep.subr.mxu0 0.0
        %678 = vmatpush1.msra.mxu0 %v642
        %679 = vmatprep.subr.mxu0 0.0
        %680 = vmatpush1.msra.mxu0 %v641
        %681 = vmatprep.subr.mxu0 0.0
        %682 = vmatpush2.msra.mxu0 0.0
        %683 = vmatprep.subr.mxu0 0.0
        %684 = vmatpush2.msra.mxu0 0.0
        %685 = vmatprep.subr.mxu0 0.0
        %686 = vmatpush2.msra.mxu0 0.0
        %687 = vmatprep.subr.mxu0 0.0
        %688 = vmatpush2.msra.mxu0 0.0
        %689 = vmatprep.subr.mxu0 0.0
        %690 = vmatpush2.msra.mxu0 0.0
        %691 = vmatprep.subr.mxu0 0.0
        %692 = vmatpush2.msra.mxu0 0.0
        %693 = vmatprep.subr.mxu0 0.0
        %694 = vmatpush2.msra.mxu0 0.0
        %695 = vmatprep.subr.mxu0 0.0
        %696 = vmatpush2.msra.mxu0 0.0
        %697 = vmatprep.subr.mxu0 0.0
        %698 = vmatpush2.msra.mxu0 0.0
        %699 = vmatprep.subr.mxu0 0.0
        %700 = vmatpush2.msra.mxu0 0.0
        %701 = vmatprep.subr.mxu0 0.0
        %702 = vmatpush2.msra.mxu0 0.0
        %703 = vmatprep.subr.mxu0 0.0
        %704 = vmatpush2.msra.mxu0 0.0
        %705 = vmatprep.subr.mxu0 0.0
        %706 = vmatpush2.msra.mxu0 0.0
        %707 = vmatprep.subr.mxu0 0.0
        %708 = vmatpush2.msra.mxu0 0.0
        %709 = vmatprep.subr.mxu0 0.0
        %710 = vmatpush2.msra.mxu0 0.0
        %711 = vmatprep.subr.mxu0 0.0
        %712 = vmatpush2.msra.mxu0 0.0
        %713 = vmatprep.mubr.f32.mxu0 0.0
        %714 = vmatmul.mubr.f32.gmra.mxu0 %v240
        %v715 = vpop.f32.mrf.mxu0
        %v716 = vadd.f32 0.0, %v715
        %v717 = vpop.f32.mrf.mxu0
        %718 = vmatprep.mubr.f32.mxu0 0.0
        %719 = vmatmul.mubr.f32.gmra.mxu0 %v242
        %v720 = vpop.f32.mrf.mxu0
        %v721 = vadd.f32 0.0, %v720
        %v722 = vpop.f32.mrf.mxu0
        %723 = vdwg.mxu0
        %724 = vmatprep.subr.mxu0 0.0
        %725 = vmatpush1.msra.mxu0 0.0
        %726 = vmatprep.subr.mxu0 0.0
        %727 = vmatpush1.msra.mxu0 0.0
        %728 = vmatprep.subr.mxu0 0.0
        %729 = vmatpush1.msra.mxu0 0.0
        %730 = vmatprep.subr.mxu0 0.0
        %731 = vmatpush1.msra.mxu0 0.0
        %732 = vmatprep.subr.mxu0 0.0
        %733 = vmatpush1.msra.mxu0 0.0
        %734 = vmatprep.subr.mxu0 0.0
        %735 = vmatpush1.msra.mxu0 0.0
        %736 = vmatprep.subr.mxu0 0.0
        %737 = vmatpush1.msra.mxu0 0.0
        %738 = vmatprep.subr.mxu0 0.0
        %739 = vmatpush1.msra.mxu0 0.0
        %740 = vmatprep.subr.mxu0 0.0
        %741 = vmatpush1.msra.mxu0 %v639
        %742 = vmatprep.subr.mxu0 0.0
        %743 = vmatpush1.msra.mxu0 %v638
        %744 = vmatprep.subr.mxu0 0.0
        %745 = vmatpush1.msra.mxu0 %v637
        %746 = vmatprep.subr.mxu0 0.0
        %747 = vmatpush1.msra.mxu0 %v636
        %748 = vmatprep.subr.mxu0 0.0
        %749 = vmatpush1.msra.mxu0 %v635
        %750 = vmatprep.subr.mxu0 0.0
        %751 = vmatpush1.msra.mxu0 %v634
        %752 = vmatprep.subr.mxu0 0.0
        %753 = vmatpush1.msra.mxu0 %v633
        %754 = vmatprep.subr.mxu0 0.0
        %755 = vmatpush1.msra.mxu0 %v632
        %756 = vmatprep.subr.mxu0 0.0
        %757 = vmatpush2.msra.mxu0 0.0
        %758 = vmatprep.subr.mxu0 0.0
        %759 = vmatpush2.msra.mxu0 0.0
        %760 = vmatprep.subr.mxu0 0.0
        %761 = vmatpush2.msra.mxu0 0.0
        %762 = vmatprep.subr.mxu0 0.0
        %763 = vmatpush2.msra.mxu0 0.0
        %764 = vmatprep.subr.mxu0 0.0
        %765 = vmatpush2.msra.mxu0 0.0
        %766 = vmatprep.subr.mxu0 0.0
        %767 = vmatpush2.msra.mxu0 0.0
        %768 = vmatprep.subr.mxu0 0.0
        %769 = vmatpush2.msra.mxu0 0.0
        %770 = vmatprep.subr.mxu0 0.0
        %771 = vmatpush2.msra.mxu0 0.0
        %772 = vmatprep.subr.mxu0 0.0
        %773 = vmatpush2.msra.mxu0 0.0
        %774 = vmatprep.subr.mxu0 0.0
        %775 = vmatpush2.msra.mxu0 0.0
        %776 = vmatprep.subr.mxu0 0.0
        %777 = vmatpush2.msra.mxu0 0.0
        %778 = vmatprep.subr.mxu0 0.0
        %779 = vmatpush2.msra.mxu0 0.0
        %780 = vmatprep.subr.mxu0 0.0
        %781 = vmatpush2.msra.mxu0 0.0
        %782 = vmatprep.subr.mxu0 0.0
        %783 = vmatpush2.msra.mxu0 0.0
        %784 = vmatprep.subr.mxu0 0.0
        %785 = vmatpush2.msra.mxu0 0.0
        %786 = vmatprep.subr.mxu0 0.0
        %787 = vmatpush2.msra.mxu0 0.0
        %788 = vmatprep.mubr.f32.mxu0 0.0
        %789 = vmatmul.mubr.f32.gmra.mxu0 %v320
        %v790 = vpop.f32.mrf.mxu0
        %v791 = vadd.f32 %v716, %v790
        %v792 = vpop.f32.mrf.mxu0
        %793 = vmatprep.mubr.f32.mxu0 0.0
        %794 = vmatmul.mubr.f32.gmra.mxu0 %v322
        %v795 = vpop.f32.mrf.mxu0
        %v796 = vadd.f32 %v721, %v795
        %v797 = vpop.f32.mrf.mxu0
        %798 = vdwg.mxu0
        %s799 = scalar_lea.vmem [#allocation5], 320
        %v800 = vld [vmem:[%s799] sm:$0xff]
        %v801 = vld [vmem:[%s799 + $0x8] sm:$0xff]
        %v802 = vld [vmem:[%s799 + $0x10] sm:$0xff]
        %v803 = vld [vmem:[%s799 + $0x18] sm:$0xff]
        %v804 = vld [vmem:[%s799 + $0x20] sm:$0xff]
        %v805 = vld [vmem:[%s799 + $0x28] sm:$0xff]
        %v806 = vld [vmem:[%s799 + $0x30] sm:$0xff]
        %v807 = vld [vmem:[%s799 + $0x38] sm:$0xff]
        %808 = vmatprep.subr.mxu0 0.0
        %809 = vmatpush1.msra.mxu0 0.0
        %810 = vmatprep.subr.mxu0 0.0
        %811 = vmatpush1.msra.mxu0 0.0
        %812 = vmatprep.subr.mxu0 0.0
        %813 = vmatpush1.msra.mxu0 0.0
        %814 = vmatprep.subr.mxu0 0.0
        %815 = vmatpush1.msra.mxu0 0.0
        %816 = vmatprep.subr.mxu0 0.0
        %817 = vmatpush1.msra.mxu0 0.0
        %818 = vmatprep.subr.mxu0 0.0
        %819 = vmatpush1.msra.mxu0 0.0
        %820 = vmatprep.subr.mxu0 0.0
        %821 = vmatpush1.msra.mxu0 0.0
        %822 = vmatprep.subr.mxu0 0.0
        %823 = vmatpush1.msra.mxu0 0.0
        %824 = vmatprep.subr.mxu0 0.0
        %825 = vmatpush1.msra.mxu0 %v807
        %826 = vmatprep.subr.mxu0 0.0
        %827 = vmatpush1.msra.mxu0 %v806
        %828 = vmatprep.subr.mxu0 0.0
        %829 = vmatpush1.msra.mxu0 %v805
        %830 = vmatprep.subr.mxu0 0.0
        %831 = vmatpush1.msra.mxu0 %v804
        %832 = vmatprep.subr.mxu0 0.0
        %833 = vmatpush1.msra.mxu0 %v803
        %834 = vmatprep.subr.mxu0 0.0
        %835 = vmatpush1.msra.mxu0 %v802
        %836 = vmatprep.subr.mxu0 0.0
        %837 = vmatpush1.msra.mxu0 %v801
        %838 = vmatprep.subr.mxu0 0.0
        %839 = vmatpush1.msra.mxu0 %v800
        %840 = vmatprep.subr.mxu0 0.0
        %841 = vmatpush2.msra.mxu0 0.0
        %842 = vmatprep.subr.mxu0 0.0
        %843 = vmatpush2.msra.mxu0 0.0
        %844 = vmatprep.subr.mxu0 0.0
        %845 = vmatpush2.msra.mxu0 0.0
        %846 = vmatprep.subr.mxu0 0.0
        %847 = vmatpush2.msra.mxu0 0.0
        %848 = vmatprep.subr.mxu0 0.0
        %849 = vmatpush2.msra.mxu0 0.0
        %850 = vmatprep.subr.mxu0 0.0
        %851 = vmatpush2.msra.mxu0 0.0
        %852 = vmatprep.subr.mxu0 0.0
        %853 = vmatpush2.msra.mxu0 0.0
        %854 = vmatprep.subr.mxu0 0.0
        %855 = vmatpush2.msra.mxu0 0.0
        %856 = vmatprep.subr.mxu0 0.0
        %857 = vmatpush2.msra.mxu0 0.0
        %858 = vmatprep.subr.mxu0 0.0
        %859 = vmatpush2.msra.mxu0 0.0
        %860 = vmatprep.subr.mxu0 0.0
        %861 = vmatpush2.msra.mxu0 0.0
        %862 = vmatprep.subr.mxu0 0.0
        %863 = vmatpush2.msra.mxu0 0.0
        %864 = vmatprep.subr.mxu0 0.0
        %865 = vmatpush2.msra.mxu0 0.0
        %866 = vmatprep.subr.mxu0 0.0
        %867 = vmatpush2.msra.mxu0 0.0
        %868 = vmatprep.subr.mxu0 0.0
        %869 = vmatpush2.msra.mxu0 0.0
        %870 = vmatprep.subr.mxu0 0.0
        %871 = vmatpush2.msra.mxu0 0.0
        %872 = vmatprep.mubr.f32.mxu0 0.0
        %873 = vmatmul.mubr.f32.gmra.mxu0 %v408
        %v874 = vpop.f32.mrf.mxu0
        %v875 = vadd.f32 0.0, %v874
        %v876 = vpop.f32.mrf.mxu0
        %877 = vmatprep.mubr.f32.mxu0 0.0
        %878 = vmatmul.mubr.f32.gmra.mxu0 %v411
        %v879 = vpop.f32.mrf.mxu0
        %v880 = vadd.f32 0.0, %v879
        %v881 = vpop.f32.mrf.mxu0
        %882 = vdwg.mxu0
        %v883 = vadd.f32 %v791, %v875
        %v884 = vadd.f32 %v796, %v880
        %s885 = scalar_lea.vmem %s2, 1
        %v886 = vld [vmem:[%s885] sm:$0x1]
        %v888 = vlaneseq
        %v889 = vshrl.u32 %v888, 7
        %v890 = vsub.s32 0, %v889
        %v891 = vrot.slane %v886, %v890
        %v893 = vadd.f32 %v883, %v891
        %v894 = vadd.f32 %v884, %v891
        %v897 = vcombine.high %v893, %v893
        %v899 = vunpack.c.l.s4 1966171168
        %v900 = vunpack.c.0.s8 %v899
        %v901 = vlaneseq
        %v902 = vshrl.u32 %v901, 7
        %v903 = vsub.s32 %v900, %v902
        %v904 = vrot.slane %v893, %v903
        %v906 = vunpack.c.l.s4 1966171168
        %v907 = vunpack.c.0.s8 %v906
        %v908 = vlaneseq
        %v909 = vshrl.u32 %v908, 7
        %v910 = vsub.s32 %v907, %v909
        %v911 = vrot.slane %v897, %v910
        %v912 = vcombine.high %v904, %v904
        %v913 = vcombine.high %v911, %v911
        %v915 = vunpack.c.l.s4 1966171168
        %v916 = vunpack.c.0.s8 %v915
        %v917 = vlaneseq
        %v918 = vshrl.u32 %v917, 7
        %v919 = vsub.s32 %v916, %v918
        %v920 = vrot.slane %v904, %v919
        %v922 = vunpack.c.l.s4 1966171168
        %v923 = vunpack.c.0.s8 %v922
        %v924 = vlaneseq
        %v925 = vshrl.u32 %v924, 7
        %v926 = vsub.s32 %v923, %v925
        %v927 = vrot.slane %v911, %v926
        %v929 = vunpack.c.l.s4 1966171168
        %v930 = vunpack.c.0.s8 %v929
        %v931 = vlaneseq
        %v932 = vshrl.u32 %v931, 7
        %v933 = vsub.s32 %v930, %v932
        %v934 = vrot.slane %v912, %v933
        %v936 = vunpack.c.l.s4 1966171168
        %v937 = vunpack.c.0.s8 %v936
        %v938 = vlaneseq
        %v939 = vshrl.u32 %v938, 7
        %v940 = vsub.s32 %v937, %v939
        %v941 = vrot.slane %v913, %v940
        %v942 = vcombine.high %v920, %v920
        %v943 = vcombine.high %v927, %v927
        %v944 = vcombine.high %v934, %v934
        %v945 = vcombine.high %v941, %v941
        %v946 = vcombine.high %v894, %v894
        %v948 = vunpack.c.l.s4 1966171168
        %v949 = vunpack.c.0.s8 %v948
        %v950 = vlaneseq
        %v951 = vshrl.u32 %v950, 7
        %v952 = vsub.s32 %v949, %v951
        %v953 = vrot.slane %v894, %v952
        %v955 = vunpack.c.l.s4 1966171168
        %v956 = vunpack.c.0.s8 %v955
        %v957 = vlaneseq
        %v958 = vshrl.u32 %v957, 7
        %v959 = vsub.s32 %v956, %v958
        %v960 = vrot.slane %v946, %v959
        %v961 = vcombine.high %v953, %v953
        %v962 = vcombine.high %v960, %v960
        %v964 = vunpack.c.l.s4 1966171168
        %v965 = vunpack.c.0.s8 %v964
        %v966 = vlaneseq
        %v967 = vshrl.u32 %v966, 7
        %v968 = vsub.s32 %v965, %v967
        %v969 = vrot.slane %v953, %v968
        %v971 = vunpack.c.l.s4 1966171168
        %v972 = vunpack.c.0.s8 %v971
        %v973 = vlaneseq
        %v974 = vshrl.u32 %v973, 7
        %v975 = vsub.s32 %v972, %v974
        %v976 = vrot.slane %v960, %v975
        %v978 = vunpack.c.l.s4 1966171168
        %v979 = vunpack.c.0.s8 %v978
        %v980 = vlaneseq
        %v981 = vshrl.u32 %v980, 7
        %v982 = vsub.s32 %v979, %v981
        %v983 = vrot.slane %v961, %v982
        %v985 = vunpack.c.l.s4 1966171168
        %v986 = vunpack.c.0.s8 %v985
        %v987 = vlaneseq
        %v988 = vshrl.u32 %v987, 7
        %v989 = vsub.s32 %v986, %v988
        %v990 = vrot.slane %v962, %v989
        %v991 = vcombine.high %v969, %v969
        %v992 = vcombine.high %v976, %v976
        %v993 = vcombine.high %v983, %v983
        %v994 = vcombine.high %v990, %v990
        %1011 = vst [vmem:[%s203 + $0x1] sm:$0x1] %v920
        %1012 = vst [vmem:[%s203 + $0x3] sm:$0x1] %v934
        %1013 = vst [vmem:[%s203 + $0x5] sm:$0x1] %v942
        %1014 = vst [vmem:[%s203 + $0x7] sm:$0x1] %v944
        %1015 = vst [vmem:[%s203 + $0x9] sm:$0x1] %v927
        %1016 = vst [vmem:[%s203 + $0xb] sm:$0x1] %v941
        %1017 = vst [vmem:[%s203 + $0xd] sm:$0x1] %v943
        %1018 = vst [vmem:[%s203 + $0xf] sm:$0x1] %v945
        %1019 = vst [vmem:[%s203 + $0x11] sm:$0x1] %v969
        %1020 = vst [vmem:[%s203 + $0x13] sm:$0x1] %v983
        %1021 = vst [vmem:[%s203 + $0x15] sm:$0x1] %v991
        %1022 = vst [vmem:[%s203 + $0x17] sm:$0x1] %v993
        %1023 = vst [vmem:[%s203 + $0x19] sm:$0x1] %v976
        %1024 = vst [vmem:[%s203 + $0x1b] sm:$0x1] %v990
        %1025 = vst [vmem:[%s203 + $0x1d] sm:$0x1] %v992
        %1026 = vst [vmem:[%s203 + $0x1f] sm:$0x1] %v994
        %s1027 = sand.u32 %s97, 1
        %s1028 = scalar_lea.sflag [#allocation4], %s1027
        %s1029 = sand.u32 %s97, 1
        %s1030 = smul.addr %s1029, 32
        %s1031 = scalar_lea.vmem [#allocation7], %s1030
        // Predicated region
        $region41: #{tpu_custom_call.1} parent=31 // pred_check
          %p1032 = pneg %p107
        $region42: #{tpu_custom_call.1} parent=31 // pred_check_branch
          %1034 = sbr.rel (%p1032) target = $region44
        $region43: #{tpu_custom_call.1} parent=31 // pred_region
          %s1036 = ssub.s32 512, 512
          %1037 = vsyncadd %s1028, %s1036
          %s1038 = smul.addr %s21, 16
          %s1039 = smul.addr %s1038, 32
          %s1040 = scalar_lea.hbm %s3, %s1039
          %s1041 = sshll.u32 %s1031, 4
          %s1042 = int_to_ptr.vmem [resolvable:$true] %s1041
          %1047 = dma.vmem_to_hbm [thread:$0]  %s1042, 512, %s1040, %s1028, 32, 32, 2
        $region44: #{tpu_custom_call.1} parent=31 // pred_fallthru
          _
      $region32: #{tpu_custom_call.1} parent=5 // pred_fallthru
        _
      %p1048 = scmp.le.s32.totalorder 2, %s16
      // Predicated region
      $region45: #{tpu_custom_call.1} parent=5 // pred_check
        %p1049 = pneg %p1048
      $region46: #{tpu_custom_call.1} parent=5 // pred_check_branch
        %1051 = sbr.rel (%p1049) target = $region48
      $region47: #{tpu_custom_call.1} parent=5 // pred_region
        %s1052 = ssub.s32 %s16, 2
        // Predicated region
        $region49: #{tpu_custom_call.1} parent=47 // pred_check
          %p1053 = pneg %p113
        $region50: #{tpu_custom_call.1} parent=47 // pred_check_branch
          %1055 = sbr.rel (%p1053) target = $region52
        $region51: #{tpu_custom_call.1} parent=47 // pred_region
          %s1056 = sand.u32 %s98, 1
          %s1057 = scalar_lea.sflag [#allocation4], %s1056
          %s1058 = sand.u32 %s98, 1
          %s1059 = smul.addr %s1058, 32
          %s1060 = scalar_lea.vmem [#allocation7], %s1059
          %1061 = dma.done %s1057, 512
        $region52: #{tpu_custom_call.1} parent=47 // pred_fallthru
          _
      $region48: #{tpu_custom_call.1} parent=5 // pred_fallthru
        _
    $region6: #{tpu_custom_call.1} parent=1 // loop_footer
      %s20 = sadd.s32 1, %s16
    $region7: #{tpu_custom_call.1} parent=1 // loop_footer_branch
      %15 = sbr.rel target = $region3
    $region8: #{tpu_custom_call.1} parent=1 // loop_exit
      _
    %1062 = vsyncpa [#allocation3], 1
    %s1063 = scalar_lea.sflag [#allocation3], 1
    %1064 = vsyncpa %s1063, 1
    %1065 = vsyncpa [#allocation6], 1
    %1066 = vsyncpa [#allocation4], 1
    %s1067 = scalar_lea.sflag [#allocation4], 1
    %1068 = vsyncpa %s1067, 1

</llo_original>
